<compile_context>
chip_gen: v5e
topology: v5e:2x2
jax: 0.10.0
libtpu: 0.0.40
codegen_flags: <defaults>
</compile_context>

<pallas_src>
import math

import jax
import jax.numpy as jnp
from jax.experimental import pallas as pl
from jax.experimental.pallas import tpu as pltpu


# ------------------------------ helpers -------------------------------------

def _round_up(x, m):
    return (x + m - 1) // m * m


def _pick_tile(total, candidates=(512, 256, 128)):
    """Largest lane-dense tile that divides `total` (total is a multiple of 128)."""
    for c in candidates:
        if total >= c and total % c == 0:
            return c
    return total


def _vmem_limit(est_bytes):
    # Generous headroom, floor 16 MiB, cap well under v7x's 64 MiB physical VMEM.
    return int(min(max(2 * est_bytes, 16 * 1024 * 1024), 48 * 1024 * 1024))


# ------------------------------ kernels -------------------------------------

def _mlp_kernel(x_ref, w1_ref, b1_ref, w2_ref, b2_ref, o_ref, h_ref):
    """Fused fc2(relu(fc1(x))).

    Grid = (B tiles, C tiles).  fc1 is computed once per batch tile (at the
    first C tile) into the VMEM scratch `h_ref`, then every C tile consumes it
    with fc2.  Weights arrive pre-transposed as (in, out): no in-kernel `.T`.
    """
    @pl.when(pl.program_id(1) == 0)
    def _():
        h = jnp.dot(x_ref[...], w1_ref[...], preferred_element_type=jnp.float32)
        h = jnp.maximum(h + b1_ref[...], 0.0)              # bias + ReLU in fp32
        h_ref[...] = h.astype(h_ref.dtype)

    o = jnp.dot(h_ref[...], w2_ref[...], preferred_element_type=jnp.float32)
    o_ref[...] = (o + b2_ref[...]).astype(o_ref.dtype)


def _linear_kernel(x_ref, w_ref, b_ref, o_ref):
    """Single fc1(x).  Grid = (C tiles, B tiles): weight tile resident across B."""
    o = jnp.dot(x_ref[...], w_ref[...], preferred_element_type=jnp.float32)
    o_ref[...] = (o + b_ref[...]).astype(o_ref.dtype)


# ------------------------------ wrapper -------------------------------------

def classifier_forward(x, params, hid_dim=None, compute_dtype=None):
    """Pallas equivalent of CLASSIFIER.forward.

    params (PyTorch nn.Linear layout, i.e. weight is (out_features, in_features)):
      hid_dim is None:     {'w1': (C, D), 'b1': (C,)}
      hid_dim is not None: {'w1': (H, D), 'b1': (H,), 'w2': (C, H), 'b2': (C,)}

    compute_dtype: optional dtype (e.g. jnp.bfloat16) for x / weights on the
    MXU.  Accumulation is always fp32; output keeps x's dtype.
    """
    orig_dtype = x.dtype
    out_itemsize = jnp.dtype(orig_dtype).itemsize
    B, D = x.shape
    cdt = jnp.dtype(compute_dtype) if compute_dtype is not None else jnp.dtype(orig_dtype)
    itb = cdt.itemsize

    # Batch tiling (sublane-aligned), pad batch to a tile multiple.
    tb = min(_round_up(B, 8), 128)
    Bp = _round_up(B, tb)
    if Bp != B:
        x = jnp.pad(x, ((0, Bp - B), (0, 0)))
    x = x.astype(cdt)

    if hid_dim is not None:
        w1, b1, w2, b2 = params["w1"], params["b1"], params["w2"], params["b2"]
        H = w1.shape[0]
        C = w2.shape[0]
        Hp = _round_up(H, 128)
        Cp = _round_up(C, 128)

        # Pre-transpose to (in, out) and zero-pad to lane-dense sizes (once, in XLA).
        w1t = jnp.pad(w1.T.astype(cdt), ((0, 0), (0, Hp - H)))            # (D, Hp)
        b1p = jnp.pad(b1.astype(jnp.float32), (0, Hp - H)).reshape(1, Hp)
        w2t = jnp.pad(w2.T.astype(cdt), ((0, Hp - H), (0, Cp - C)))       # (Hp, Cp)
        b2p = jnp.pad(b2.astype(jnp.float32), (0, Cp - C)).reshape(1, Cp)

        tc = _pick_tile(Cp)
        grid = (Bp // tb, Cp // tc)

        # VMEM budget: resident (w1, b1, h scratch) + double-buffered streamed tiles.
        resident = D * Hp * itb + Hp * 4 + tb * Hp * itb
        streamed = 2 * (tb * D * itb + Hp * tc * itb + tc * 4 + tb * tc * out_itemsize)
        vmem_bytes = _vmem_limit(resident + streamed)

        bytes_accessed = (Bp * D * itb + D * Hp * itb + Hp * Cp * itb
                          + Hp * 4 + Cp * 4 + Bp * Cp * out_itemsize)
        cost = pl.CostEstimate(flops=2 * B * D * H + 2 * B * H * C,
                               transcendentals=0,
                               bytes_accessed=bytes_accessed)

        out = pl.pallas_call(
            _mlp_kernel,
            out_shape=jax.ShapeDtypeStruct((Bp, Cp), orig_dtype),
            grid_spec=pltpu.PrefetchScalarGridSpec(
                num_scalar_prefetch=0,
                grid=grid,
                in_specs=[
                    pl.BlockSpec((tb, D), lambda i, j: (i, 0)),    # x batch tile
                    pl.BlockSpec((D, Hp), lambda i, j: (0, 0)),    # W1 resident
                    pl.BlockSpec((1, Hp), lambda i, j: (0, 0)),    # b1 resident
                    pl.BlockSpec((Hp, tc), lambda i, j: (0, j)),   # W2 C-tile
                    pl.BlockSpec((1, tc), lambda i, j: (0, j)),    # b2 C-tile
                ],
                out_specs=pl.BlockSpec((tb, tc), lambda i, j: (i, j)),
                scratch_shapes=[pltpu.VMEM((tb, Hp), cdt)],        # fc1 activations
            ),
            compiler_params=pltpu.CompilerParams(
                dimension_semantics=("parallel", "arbitrary"),
                vmem_limit_bytes=vmem_bytes,
            ),
            cost_estimate=cost,
        )(x, w1t, b1p, w2t, b2p)
        return out[:B, :C]

    else:
        w1, b1 = params["w1"], params["b1"]
        C = w1.shape[0]
        Cp = _round_up(C, 128)

        wt = jnp.pad(w1.T.astype(cdt), ((0, 0), (0, Cp - C)))             # (D, Cp)
        bp = jnp.pad(b1.astype(jnp.float32), (0, Cp - C)).reshape(1, Cp)

        tc = _pick_tile(Cp)
        # Grid (C tiles, B tiles): weight/bias tiles stay resident across the
        # inner batch loop → each weight byte is DMA'd once per call.
        grid = (Cp // tc, Bp // tb)

        streamed = 2 * (tb * D * itb + D * tc * itb + tc * 4 + tb * tc * out_itemsize)
        vmem_bytes = _vmem_limit(streamed)

        bytes_accessed = Bp * D * itb + D * Cp * itb + Cp * 4 + Bp * Cp * out_itemsize
        cost = pl.CostEstimate(flops=2 * B * D * C,
                               transcendentals=0,
                               bytes_accessed=bytes_accessed)

        out = pl.pallas_call(
            _linear_kernel,
            out_shape=jax.ShapeDtypeStruct((Bp, Cp), orig_dtype),
            grid_spec=pltpu.PrefetchScalarGridSpec(
                num_scalar_prefetch=0,
                grid=grid,
                in_specs=[
                    pl.BlockSpec((tb, D), lambda j, i: (i, 0)),    # x batch tile
                    pl.BlockSpec((D, tc), lambda j, i: (0, j)),    # W C-tile
                    pl.BlockSpec((1, tc), lambda j, i: (0, j)),    # b C-tile
                ],
                out_specs=pl.BlockSpec((tb, tc), lambda j, i: (i, j)),
            ),
            compiler_params=pltpu.CompilerParams(
                dimension_semantics=("parallel", "parallel"),
                vmem_limit_bytes=vmem_bytes,
            ),
            cost_estimate=cost,
        )(x, wt, bp)
        return out[:B, :C]


# ------------------------------ init + reference ----------------------------

def init_classifier_params(key, input_dim, nclass, hid_dim=None):
    """Deterministic init mimicking nn.Linear's default U(-1/sqrt(fan_in), ...)."""
    def linear_init(k, out_f, in_f):
        kw, kb = jax.random.split(k)
        bound = 1.0 / math.sqrt(in_f)
        w = jax.random.uniform(kw, (out_f, in_f), jnp.float32, -bound, bound)
        b = jax.random.uniform(kb, (out_f,), jnp.float32, -bound, bound)
        return w, b

    if hid_dim is not None:
        k1, k2 = jax.random.split(key)
        w1, b1 = linear_init(k1, hid_dim, input_dim)
        w2, b2 = linear_init(k2, nclass, hid_dim)
        return {"w1": w1, "b1": b1, "w2": w2, "b2": b2}
    else:
        w1, b1 = linear_init(key, nclass, input_dim)
        return {"w1": w1, "b1": b1}


def _ref_forward(x, params, hid_dim=None):
    if hid_dim is not None:
        h = jnp.maximum(x @ params["w1"].T + params["b1"], 0.0)
        return h @ params["w2"].T + params["b2"]
    return x @ params["w1"].T + params["b1"]


# ------------------------------ test -----------------------------------------

if __name__ == "__main__":
    key = jax.random.PRNGKey(0)
    kx, kp1, kp2 = jax.random.split(key, 3)

    # Small shapes consistent with the module: x is (batch, input_dim)
    B, input_dim, hid_dim, nclass = 8, 32, 32, 16
    x = jax.random.normal(kx, (B, input_dim), dtype=jnp.float32)

    # Case 1: hid_dim is not None -> fc2(relu(fc1(x))), fp32 compute path
    params_mlp = init_classifier_params(kp1, input_dim, nclass, hid_dim=hid_dim)
    out_mlp = jax.block_until_ready(classifier_forward(x, params_mlp, hid_dim=hid_dim))
    ref_mlp = _ref_forward(x, params_mlp, hid_dim=hid_dim)
    assert out_mlp.shape == (B, nclass)
    assert jnp.allclose(out_mlp, ref_mlp, atol=1e-5, rtol=1e-5)

    # Case 1b: same module, bf16 compute dtype (fast MXU path), loose tolerance
    out_bf16 = jax.block_until_ready(
        classifier_forward(x, params_mlp, hid_dim=hid_dim, compute_dtype=jnp.bfloat16))
    assert out_bf16.shape == (B, nclass)
    assert jnp.allclose(out_bf16, ref_mlp, atol=5e-2, rtol=5e-2)

    # Case 2: hid_dim is None -> fc1(x)
    params_lin = init_classifier_params(kp2, input_dim, nclass, hid_dim=None)
    out_lin = jax.block_until_ready(classifier_forward(x, params_lin, hid_dim=None))
    ref_lin = _ref_forward(x, params_lin, hid_dim=None)
    assert out_lin.shape == (B, nclass)
    assert jnp.allclose(out_lin, ref_lin, atol=1e-5, rtol=1e-5)

    print("KERNEL_OK")
</pallas_src>

<mosaic_0001>
module attributes {stable_mosaic.version = 11 : i64} {
  func.func @_mlp_kernel(%arg0: i32, %arg1: i32, %arg2: memref<8x32xf32, #tpu.memory_space<vmem>>, %arg3: memref<32x128xf32, #tpu.memory_space<vmem>>, %arg4: memref<1x128xf32, #tpu.memory_space<vmem>>, %arg5: memref<128x128xf32, #tpu.memory_space<vmem>>, %arg6: memref<1x128xf32, #tpu.memory_space<vmem>>, %arg7: memref<8x128xf32, #tpu.memory_space<vmem>>, %arg8: memref<8x128xf32, #tpu.memory_space<vmem>>) attributes {dimension_semantics = [#tpu.dimension_semantics<parallel>, #tpu.dimension_semantics<arbitrary>], iteration_bounds = array<i64: 1, 1>, scalar_prefetch = 0 : i64, scratch_operands = 1 : i64, tpu.core_type = #tpu.core_type<tc>, window_params = [{transform_indices = @transform_0, window_bounds = array<i64: 8, 32>}, {pipeline_mode = #tpu.pipeline_mode<synchronous>, transform_indices = @transform_1, window_bounds = array<i64: 32, 128>}, {pipeline_mode = #tpu.pipeline_mode<synchronous>, transform_indices = @transform_2, window_bounds = array<i64: 1, 128>}, {transform_indices = @transform_3, window_bounds = array<i64: 128, 128>}, {transform_indices = @transform_4, window_bounds = array<i64: 1, 128>}, {transform_indices = @transform_5, window_bounds = array<i64: 8, 128>}]} {
    %c0_i32 = arith.constant 0 : i32
    %0 = arith.cmpi eq, %arg1, %c0_i32 : i32
    %1 = arith.extui %0 : i1 to i32
    %c0_i32_0 = arith.constant 0 : i32
    %2 = arith.cmpi ne, %1, %c0_i32_0 : i32
    scf.if %2 {
      %c0_8 = arith.constant 0 : index
      %c0_9 = arith.constant 0 : index
      %10 = vector.load %arg2[%c0_8, %c0_9] : memref<8x32xf32, #tpu.memory_space<vmem>>, vector<8x32xf32>
      %c0_10 = arith.constant 0 : index
      %c0_11 = arith.constant 0 : index
      %11 = vector.load %arg3[%c0_10, %c0_11] : memref<32x128xf32, #tpu.memory_space<vmem>>, vector<32x128xf32>
      %cst_12 = arith.constant dense<0.000000e+00> : vector<8x128xf32>
      %12 = tpu.matmul %10, %11, %cst_12 {dimension_numbers = #tpu.dot_dimension_numbers<[1], [0], [0], [1], [0, 0, 1, 1], [], []>} : vector<8x32xf32>, vector<32x128xf32>, vector<8x128xf32> -> vector<8x128xf32>
      %c0_13 = arith.constant 0 : index
      %c0_14 = arith.constant 0 : index
      %13 = vector.load %arg4[%c0_13, %c0_14] : memref<1x128xf32, #tpu.memory_space<vmem>>, vector<1x128xf32>
      %14 = vector.broadcast %13 : vector<1x128xf32> to vector<8x128xf32>
      %15 = arith.addf %12, %14 : vector<8x128xf32>
      %cst_15 = arith.constant 0.000000e+00 : f32
      %16 = vector.broadcast %cst_15 : f32 to vector<8x128xf32>
      %17 = arith.maximumf %15, %16 : vector<8x128xf32>
      %c0_16 = arith.constant 0 : index
      %c0_17 = arith.constant 0 : index
      %18 = vector.load %arg8[%c0_16, %c0_17] : memref<8x128xf32, #tpu.memory_space<vmem>>, vector<8x128xf32>
      tpu.vector_store %arg8[%c0_16, %c0_17], %17 {strides = array<i32>} : memref<8x128xf32, #tpu.memory_space<vmem>>, vector<8x128xf32>,
    } else {
    }
    %c0 = arith.constant 0 : index
    %c0_1 = arith.constant 0 : index
    %3 = vector.load %arg8[%c0, %c0_1] : memref<8x128xf32, #tpu.memory_space<vmem>>, vector<8x128xf32>
    %c0_2 = arith.constant 0 : index
    %c0_3 = arith.constant 0 : index
    %4 = vector.load %arg5[%c0_2, %c0_3] : memref<128x128xf32, #tpu.memory_space<vmem>>, vector<128x128xf32>
    %cst = arith.constant dense<0.000000e+00> : vector<8x128xf32>
    %5 = tpu.matmul %3, %4, %cst {dimension_numbers = #tpu.dot_dimension_numbers<[1], [0], [0], [1], [0, 0, 1, 1], [], []>} : vector<8x128xf32>, vector<128x128xf32>, vector<8x128xf32> -> vector<8x128xf32>
    %c0_4 = arith.constant 0 : index
    %c0_5 = arith.constant 0 : index
    %6 = vector.load %arg6[%c0_4, %c0_5] : memref<1x128xf32, #tpu.memory_space<vmem>>, vector<1x128xf32>
    %7 = vector.broadcast %6 : vector<1x128xf32> to vector<8x128xf32>
    %8 = arith.addf %5, %7 : vector<8x128xf32>
    %c0_6 = arith.constant 0 : index
    %c0_7 = arith.constant 0 : index
    %9 = vector.load %arg7[%c0_6, %c0_7] : memref<8x128xf32, #tpu.memory_space<vmem>>, vector<8x128xf32>
    tpu.vector_store %arg7[%c0_6, %c0_7], %8 {strides = array<i32>} : memref<8x128xf32, #tpu.memory_space<vmem>>, vector<8x128xf32>,
    return
  }
  func.func @transform_0(%arg0: i32, %arg1: i32) -> (i32, i32) {
    %c0_i32 = arith.constant 0 : i32
    %c0_i32_0 = arith.constant 0 : i32
    return %arg0, %c0_i32 : i32, i32
  }
  func.func @transform_1(%arg0: i32, %arg1: i32) -> (i32, i32) {
    %c0_i32 = arith.constant 0 : i32
    %c0_i32_0 = arith.constant 0 : i32
    %c0_i32_1 = arith.constant 0 : i32
    return %c0_i32, %c0_i32_0 : i32, i32
  }
  func.func @transform_2(%arg0: i32, %arg1: i32) -> (i32, i32) {
    %c0_i32 = arith.constant 0 : i32
    %c0_i32_0 = arith.constant 0 : i32
    %c0_i32_1 = arith.constant 0 : i32
    return %c0_i32, %c0_i32_0 : i32, i32
  }
  func.func @transform_3(%arg0: i32, %arg1: i32) -> (i32, i32) {
    %c0_i32 = arith.constant 0 : i32
    %c0_i32_0 = arith.constant 0 : i32
    return %c0_i32, %arg1 : i32, i32
  }
  func.func @transform_4(%arg0: i32, %arg1: i32) -> (i32, i32) {
    %c0_i32 = arith.constant 0 : i32
    %c0_i32_0 = arith.constant 0 : i32
    return %c0_i32, %arg1 : i32, i32
  }
  func.func @transform_5(%arg0: i32, %arg1: i32) -> (i32, i32) {
    %c0_i32 = arith.constant 0 : i32
    return %arg0, %arg1 : i32, i32
  }
}

</mosaic_0001>

<llo_original>
// kernel: tpu_custom_call.1
$region0: #{tpu_custom_call.1}
  #allocation0 [shape = 'u32[]', space=smem, size = 0x4, offset = 0x4, fixed_abs, tag = 'smem constant byte address 0x4 - core index']
  #allocation1 [shape = 'u32[72,128]{1,0:T(1,128)}', space=vmem, size = 0x9000, scoped, tag = 'internal scratch']
  #allocation2 [shape = 'f32[8,128]{1,0:T(8,128)}', space=vmem, size = 0x1000, scoped, tag = 'scratch operand']
  %s0 = inlined_call_operand.hbm [shape: f32[8,32], index: 0, kind: input, shape index: {}]
  %s1 = inlined_call_operand.hbm [shape: f32[32,128], index: 1, kind: input, shape index: {}]
  %s2 = inlined_call_operand.vmem [shape: f32[1,128], index: 2, kind: input, shape index: {}]
  %s3 = inlined_call_operand.hbm [shape: f32[128,128], index: 3, kind: input, shape index: {}]
  %s4 = inlined_call_operand.vmem [shape: f32[1,128], index: 4, kind: input, shape index: {}]
  %s5 = inlined_call_operand.hbm [shape: f32[8,128], index: 5, kind: output, shape index: {}]
  %s6 = sld [smem:[#allocation0]]
  $region46: #{tpu_custom_call.1} parent=0
    _
  %s8 = ssub.s32 1, %s6
  %s9 = scalar_select 0, %s8, %s6
  $region1: #{tpu_custom_call.1} parent=0
    #allocation3 [shape = 'u8[4096]{0}', space=vmem, size = 0x1000, scoped, tag = 'input window, operand 0, single buffered']
    #allocation4 [shape = 's32[1]{0}', space=sflag, size = 0x4, scoped, tag = 'scoped memory for tpu_custom_call.1']
    #allocation5 [shape = 's32[1]{0}', space=sflag, size = 0x4, scoped, tag = 'scoped memory for tpu_custom_call.1']
    #allocation6 [shape = 'u8[16384]{0}', space=vmem, size = 0x4000, scoped, tag = 'input window, operand 1, single buffered']
    #allocation7 [shape = 's32[1]{0}', space=sflag, size = 0x4, scoped, tag = 'scoped memory for tpu_custom_call.1']
    #allocation8 [shape = 'u8[65536]{0}', space=vmem, size = 0x10000, scoped, tag = 'input window, operand 3, single buffered']
    #allocation9 [shape = 'u8[4096]{0}', space=vmem, size = 0x1000, scoped, tag = 'output window, operand 0, single buffered']
    %10 = vsyncpa [#allocation4], 0
    %11 = vsyncpa [#allocation7], 0
    %12 = vsyncpa [#allocation5], 0
    // Predicated region
    $region2: #{tpu_custom_call.1} parent=1 // pred_check
      _
    $region3: #{tpu_custom_call.1} parent=1 // pred_check_branch
      %14 = sbr.rel (0) target = $region5
    $region4: #{tpu_custom_call.1} parent=1 // pred_region
      %16 = vsyncadd [#allocation4], 0
      %s18 = sshll.u32 %s0, 4
      %s19 = int_to_ptr.hbm [resolvable:$true] %s18
      %s20 = sshll.u32 [#allocation3], 4
      %s21 = int_to_ptr.vmem [resolvable:$true] %s20
      %23 = dma.hbm_to_vmem [thread:$0]  %s19, 128, %s21, [#allocation4]
    $region5: #{tpu_custom_call.1} parent=1 // pred_fallthru
      _
    // Predicated region
    $region6: #{tpu_custom_call.1} parent=1 // pred_check
      _
    $region7: #{tpu_custom_call.1} parent=1 // pred_check_branch
      %25 = sbr.rel (0) target = $region9
    $region8: #{tpu_custom_call.1} parent=1 // pred_region
      %27 = vsyncadd [#allocation7], 0
      %s28 = sshll.u32 %s1, 4
      %s29 = int_to_ptr.hbm [resolvable:$true] %s28
      %s30 = sshll.u32 [#allocation6], 4
      %s31 = int_to_ptr.vmem [resolvable:$true] %s30
      %36 = dma.hbm_to_vmem [thread:$0]  %s29, 512, %s31, [#allocation7], 128, 128, 8
    $region9: #{tpu_custom_call.1} parent=1 // pred_fallthru
      _
    // Predicated region
    $region10: #{tpu_custom_call.1} parent=1 // pred_check
      _
    $region11: #{tpu_custom_call.1} parent=1 // pred_check_branch
      %38 = sbr.rel (0) target = $region13
    $region12: #{tpu_custom_call.1} parent=1 // pred_region
      _
    $region13: #{tpu_custom_call.1} parent=1 // pred_fallthru
      _
    // Predicated region
    $region14: #{tpu_custom_call.1} parent=1 // pred_check
      _
    $region15: #{tpu_custom_call.1} parent=1 // pred_check_branch
      %40 = sbr.rel (0) target = $region17
    $region16: #{tpu_custom_call.1} parent=1 // pred_region
      %42 = vsyncadd [#allocation7], 0
      %s43 = sshll.u32 %s3, 4
      %s44 = int_to_ptr.hbm [resolvable:$true] %s43
      %s45 = sshll.u32 [#allocation8], 4
      %s46 = int_to_ptr.vmem [resolvable:$true] %s45
      %51 = dma.hbm_to_vmem [thread:$0]  %s44, 2048, %s46, [#allocation7], 128, 128, 8
    $region17: #{tpu_custom_call.1} parent=1 // pred_fallthru
      _
    // Predicated region
    $region18: #{tpu_custom_call.1} parent=1 // pred_check
      _
    $region19: #{tpu_custom_call.1} parent=1 // pred_check_branch
      %53 = sbr.rel (0) target = $region21
    $region20: #{tpu_custom_call.1} parent=1 // pred_region
      _
    $region21: #{tpu_custom_call.1} parent=1 // pred_fallthru
      _
    // Predicated region
    $region22: #{tpu_custom_call.1} parent=1 // pred_check
      _
    $region23: #{tpu_custom_call.1} parent=1 // pred_check_branch
      %55 = sbr.rel (0) target = $region25
    $region24: #{tpu_custom_call.1} parent=1 // pred_region
      %57 = dma.done [#allocation4], 128
    $region25: #{tpu_custom_call.1} parent=1 // pred_fallthru
      _
    // Predicated region
    $region26: #{tpu_custom_call.1} parent=1 // pred_check
      _
    $region27: #{tpu_custom_call.1} parent=1 // pred_check_branch
      %59 = sbr.rel (0) target = $region29
    $region28: #{tpu_custom_call.1} parent=1 // pred_region
      %61 = dma.done [#allocation7], 512
    $region29: #{tpu_custom_call.1} parent=1 // pred_fallthru
      _
    // Predicated region
    $region30: #{tpu_custom_call.1} parent=1 // pred_check
      _
    $region31: #{tpu_custom_call.1} parent=1 // pred_check_branch
      %63 = sbr.rel (0) target = $region33
    $region32: #{tpu_custom_call.1} parent=1 // pred_region
      %65 = dma.done [#allocation7], 2048
    $region33: #{tpu_custom_call.1} parent=1 // pred_fallthru
      _
    %p66 = scmp.eq.s32.totalorder 0, 0
    // Predicated region
    $region34: #{tpu_custom_call.1} parent=1 // pred_check
      %p67 = pneg %p66
    $region35: #{tpu_custom_call.1} parent=1 // pred_check_branch
      %69 = sbr.rel (%p67) target = $region37
    $region36: #{tpu_custom_call.1} parent=1 // pred_region
      %v70 = vld [vmem:[#allocation3] sm:$0xff]
      %v71 = vld [vmem:[#allocation6] sm:$0xff]
      %v72 = vld [vmem:[#allocation6 + $0x8] sm:$0xff]
      %v73 = vld [vmem:[#allocation6 + $0x10] sm:$0xff]
      %v74 = vld [vmem:[#allocation6 + $0x18] sm:$0xff]
      %v75 = vld [vmem:[%s2] sm:$0x1]
      %v77 = vperm.slane %v75, 0
      %vm79 = vcmask 261120
      %v81 = vsel %vm79, %v70, 0
      %83 = vmatpush.msra.mxu0 0.0
      %84 = vmatpush.msra.mxu0 0.0
      %85 = vmatpush.msra.mxu0 0.0
      %86 = vmatpush.msra.mxu0 0.0
      %87 = vmatpush.msra.mxu0 0.0
      %88 = vmatpush.msra.mxu0 0.0
      %89 = vmatpush.msra.mxu0 0.0
      %90 = vmatpush.msra.mxu0 0.0
      %91 = vmatpush.msra.mxu0 0.0
      %92 = vmatpush.msra.mxu0 0.0
      %93 = vmatpush.msra.mxu0 0.0
      %94 = vmatpush.msra.mxu0 0.0
      %95 = vmatpush.msra.mxu0 %v74
      %96 = vmatpush.msra.mxu0 %v73
      %97 = vmatpush.msra.mxu0 %v72
      %98 = vmatpush.msra.mxu0 %v71
      %99 = vmatmul.f32.gmra.mxu0 %v81
      %v100 = vpop.f32.mrf.mxu0
      %v101 = vadd.f32 %v77, %v100
      %102 = vdwg.mxu0
      %v103 = vmax.f32 %v101, 0.0
      %104 = vst [vmem:[#allocation2] sm:$0xff] %v103
    $region37: #{tpu_custom_call.1} parent=1 // pred_fallthru
      _
    %v105 = vld [vmem:[#allocation2] sm:$0xff]
    %v106 = vld [vmem:[#allocation8] sm:$0xff]
    %v107 = vld [vmem:[#allocation8 + $0x8] sm:$0xff]
    %v108 = vld [vmem:[#allocation8 + $0x10] sm:$0xff]
    %v109 = vld [vmem:[#allocation8 + $0x18] sm:$0xff]
    %v110 = vld [vmem:[#allocation8 + $0x20] sm:$0xff]
    %v111 = vld [vmem:[#allocation8 + $0x28] sm:$0xff]
    %v112 = vld [vmem:[#allocation8 + $0x30] sm:$0xff]
    %v113 = vld [vmem:[#allocation8 + $0x38] sm:$0xff]
    %v114 = vld [vmem:[#allocation8 + $0x40] sm:$0xff]
    %v115 = vld [vmem:[#allocation8 + $0x48] sm:$0xff]
    %v116 = vld [vmem:[#allocation8 + $0x50] sm:$0xff]
    %v117 = vld [vmem:[#allocation8 + $0x58] sm:$0xff]
    %v118 = vld [vmem:[#allocation8 + $0x60] sm:$0xff]
    %v119 = vld [vmem:[#allocation8 + $0x68] sm:$0xff]
    %v120 = vld [vmem:[#allocation8 + $0x70] sm:$0xff]
    %v121 = vld [vmem:[#allocation8 + $0x78] sm:$0xff]
    %v122 = vld [vmem:[%s4] sm:$0x1]
    %v124 = vperm.slane %v122, 0
    %126 = vmatpush.msra.mxu0 %v121
    %127 = vmatpush.msra.mxu0 %v120
    %128 = vmatpush.msra.mxu0 %v119
    %129 = vmatpush.msra.mxu0 %v118
    %130 = vmatpush.msra.mxu0 %v117
    %131 = vmatpush.msra.mxu0 %v116
    %132 = vmatpush.msra.mxu0 %v115
    %133 = vmatpush.msra.mxu0 %v114
    %134 = vmatpush.msra.mxu0 %v113
    %135 = vmatpush.msra.mxu0 %v112
    %136 = vmatpush.msra.mxu0 %v111
    %137 = vmatpush.msra.mxu0 %v110
    %138 = vmatpush.msra.mxu0 %v109
    %139 = vmatpush.msra.mxu0 %v108
    %140 = vmatpush.msra.mxu0 %v107
    %141 = vmatpush.msra.mxu0 %v106
    %142 = vmatmul.f32.gmra.mxu0 %v105
    %v143 = vpop.f32.mrf.mxu0
    %v144 = vadd.f32 %v124, %v143
    %145 = vdwg.mxu0
    %146 = vst [vmem:[#allocation9] sm:$0xff] %v144
    // Predicated region
    $region38: #{tpu_custom_call.1} parent=1 // pred_check
      _
    $region39: #{tpu_custom_call.1} parent=1 // pred_check_branch
      %148 = sbr.rel (0) target = $region41
    $region40: #{tpu_custom_call.1} parent=1 // pred_region
      %150 = vsyncadd [#allocation5], 0
      %s152 = sshll.u32 [#allocation9], 4
      %s153 = int_to_ptr.vmem [resolvable:$true] %s152
      %s154 = sshll.u32 %s5, 4
      %s155 = int_to_ptr.hbm [resolvable:$true] %s154
      %157 = dma.vmem_to_hbm [thread:$0]  %s153, 128, %s155, [#allocation5]
    $region41: #{tpu_custom_call.1} parent=1 // pred_fallthru
      _
    // Predicated region
    $region42: #{tpu_custom_call.1} parent=1 // pred_check
      _
    $region43: #{tpu_custom_call.1} parent=1 // pred_check_branch
      %159 = sbr.rel (0) target = $region45
    $region44: #{tpu_custom_call.1} parent=1 // pred_region
      %161 = dma.done [#allocation5], 128
    $region45: #{tpu_custom_call.1} parent=1 // pred_fallthru
      _
    %162 = vsyncpa [#allocation4], 1
    %163 = vsyncpa [#allocation7], 1
    %164 = vsyncpa [#allocation5], 1

</llo_original>
